<compile_context>
chip_gen: v5e
topology: v5e:2x2
jax: 0.10.0
libtpu: 0.0.40
codegen_flags: <defaults>
</compile_context>

<pallas_src>
import functools
import math

import jax
import jax.numpy as jnp
from jax.experimental import pallas as pl
from jax.experimental.pallas import tpu as pltpu

# Hyperparameters matching FocalAsymmetricLoss.__init__ defaults.
GAMMA_NEG = 4.0
GAMMA_POS = 1.0
GAMMA = 2.0
CLIP = 0.05
EPS = 1e-8
TINY = float(jnp.finfo(jnp.float32).tiny)

# Pad values chosen so padded elements contribute exactly 0:
#   sigmoid(30) == 1.0 in f32 -> pt == 1 -> loss == log(1) == 0, base == 0 -> w == 0.
PAD_X = 30.0
PAD_Y = 1.0


def _loss_slab(xv, yv, *, hard_targets, bf16_weight):
    """Element-wise focal asymmetric loss for an (r, lanes) slab (f32 out)."""
    x = xv.astype(jnp.float32)
    y = yv.astype(jnp.float32)

    # sigmoid(x) = 0.5 + 0.5*tanh(x/2); gives 1 - sigmoid(x) for free.
    t = jnp.tanh(x * 0.5)                                # 1 EUP push
    xs_pos = 0.5 + 0.5 * t
    xs_neg = jnp.minimum((0.5 - 0.5 * t) + CLIP, 1.0)    # asymmetric prob shift

    if hard_targets:
        # y in {0, 1}: one log instead of two (EUP is the binding slot).
        pos = y > 0.0
        pt = jnp.where(pos, xs_pos, xs_neg)
        loss = jnp.log(jnp.maximum(pt, EPS))             # 1 EUP push
        gamma_sel = jnp.where(pos, GAMMA_POS, GAMMA_NEG)
    else:
        # General (soft-target) form, identical to the torch module.
        loss = (y * jnp.log(jnp.maximum(xs_pos, EPS))
                + (1.0 - y) * jnp.log(jnp.maximum(xs_neg, EPS)))   # 2 EUP pushes
        pt = xs_pos * y + xs_neg * (1.0 - y)
        gamma_sel = GAMMA_POS * y + GAMMA_NEG * (1.0 - y)

    base = 1.0 - pt
    one_sided_gamma = gamma_sel + GAMMA * base
    # pow(base, g) = exp(g * log(base)), guarded so base == 0 -> w == 0
    # (torch.pow(0, positive) == 0; avoids -inf/NaN propagation).
    if bf16_weight:
        # v6e/v7x EUP runs bf16 at 2x packed density; accumulation stays f32.
        logb = jnp.log(jnp.maximum(base, TINY).astype(jnp.bfloat16))
        w = jnp.exp(one_sided_gamma.astype(jnp.bfloat16) * logb)
        w = w.astype(jnp.float32)
    else:
        w = jnp.exp(one_sided_gamma * jnp.log(jnp.maximum(base, TINY)))  # 2 EUP
    w = jnp.where(base > 0.0, w, 0.0)
    return loss * w


def _fold8(slab):
    """Sum sublane groups of 8: (r, lanes) -> (8, lanes), aligned slice-adds."""
    r = slab.shape[0]
    acc = slab[0:8, :]
    for g in range(1, r // 8):
        acc = acc + slab[g * 8:(g + 1) * 8, :]
    return acc


def _focal_asym_kernel(x_ref, y_ref, partial_ref, *, tm, lanes, cs,
                       hard_targets, bf16_weight):
    def chunk(start, size):
        xs = x_ref[pl.ds(start, size), :]
        ys = y_ref[pl.ds(start, size), :]
        slab = _loss_slab(xs, ys, hard_targets=hard_targets,
                          bf16_weight=bf16_weight)
        return _fold8(slab)

    nchunks = tm // cs
    rem = tm - nchunks * cs          # tm, cs are multiples of 8 -> rem is too

    if nchunks == 1 and rem == 0:
        acc = chunk(0, cs)
    else:
        def body(j, acc):
            start = pl.multiple_of(j * cs, cs)
            return acc + chunk(start, cs)

        acc = jnp.zeros((8, lanes), jnp.float32)
        if nchunks > 0:
            acc = jax.lax.fori_loop(0, nchunks, body, acc)
        if rem > 0:
            acc = acc + chunk(nchunks * cs, rem)

    partial_ref[...] = acc


def _round_up(a, b):
    return -(-a // b) * b


def focal_asymmetric_loss(x, y, reduction="mean", hard_targets=False,
                          bf16_weight=False):
    """Focal asymmetric multi-label loss (forward). x: logits, y: targets.

    hard_targets=True assumes y in {0, 1} (the standard multi-label case) and
    saves one transcendental per element; the default (False) matches the
    torch module for arbitrary (soft) targets.  bf16_weight=True computes the
    focal-weight transcendentals in bf16 (worthwhile on v6e/v7x only).
    Returns a scalar float32.
    """
    assert x.shape == y.shape
    assert reduction in ("mean", "sum")
    total = int(math.prod(x.shape))

    # ---- lane-dense 2-D layout ----------------------------------------------
    # Prefer a lane width that divides the input so no padding copy is needed.
    if total % (512 * 8) == 0:
        lanes = 512
    elif total % (256 * 8) == 0:
        lanes = 256
    elif total % (128 * 8) == 0:
        lanes = 128
    elif total >= 512 * 8:
        lanes = 512
    else:
        lanes = 128
    rows = -(-total // lanes)
    rows8 = _round_up(rows, 8)

    # ---- row tiling -----------------------------------------------------------
    # ~4 MiB f32 per input DMA tile (double-buffered by BlockSpec -> ~16 MiB of
    # pipeline buffers); element-wise work is chunked inside the kernel so VMEM
    # temporaries stay small.  Tile count chosen so row over-padding is <= ~8
    # rows/tile and there are >= 2 tiles when possible (v7x megacore).
    tm_max = max(8, ((4 * 1024 * 1024) // (lanes * 4)) // 8 * 8)
    num_tiles = -(-rows8 // tm_max)
    if rows8 >= 16:
        num_tiles = max(num_tiles, 2)
    tm = _round_up(-(-rows8 // num_tiles), 8)
    rows_padded = tm * num_tiles
    padded_total = rows_padded * lanes
    cs = min(tm, 256)                     # in-kernel chunk rows (multiple of 8)

    def to_2d(a, fill):
        a = a.reshape(-1)
        if padded_total != total:
            # Pad values make padded elements contribute exactly 0, so the
            # kernel needs no mask.  Aligned inputs skip this copy entirely.
            a = jnp.pad(a, (0, padded_total - total), constant_values=fill)
        return a.reshape(rows_padded, lanes)

    x2 = to_2d(x, PAD_X)
    y2 = to_2d(y, PAD_Y)

    kernel = functools.partial(
        _focal_asym_kernel, tm=tm, lanes=lanes, cs=cs,
        hard_targets=hard_targets, bf16_weight=bf16_weight)

    partials = pl.pallas_call(
        kernel,
        out_shape=jax.ShapeDtypeStruct((num_tiles * 8, lanes), jnp.float32),
        grid_spec=pltpu.PrefetchScalarGridSpec(
            num_scalar_prefetch=0,
            grid=(num_tiles,),
            in_specs=[pl.BlockSpec((tm, lanes), lambda i: (i, 0)),
                      pl.BlockSpec((tm, lanes), lambda i: (i, 0))],
            out_specs=pl.BlockSpec((8, lanes), lambda i: (i, 0)),
        ),
        compiler_params=pltpu.CompilerParams(
            dimension_semantics=("parallel",),
            vmem_limit_bytes=32 * 1024 * 1024,
        ),
    )(x2, y2)

    # Tiny cross-tile combine (num_tiles*8 x lanes) in plain XLA.
    s = jnp.sum(partials)
    if reduction == "mean":
        return -s / jnp.float32(total)
    return -s


def _reference(x, y, reduction="mean"):
    x = x.astype(jnp.float32)
    y = y.astype(jnp.float32)
    xs_pos = jax.nn.sigmoid(x)
    xs_neg = jnp.minimum(1.0 - xs_pos + CLIP, 1.0)
    loss = y * jnp.log(jnp.maximum(xs_pos, EPS)) + (1.0 - y) * jnp.log(
        jnp.maximum(xs_neg, EPS))
    pt = xs_pos * y + xs_neg * (1.0 - y)
    g = GAMMA_POS * y + GAMMA_NEG * (1.0 - y) + GAMMA * (1.0 - pt)
    loss = loss * jnp.power(1.0 - pt, g)
    return -jnp.mean(loss) if reduction == "mean" else -jnp.sum(loss)


if __name__ == "__main__":
    key = jax.random.PRNGKey(0)
    k0, k1, k2, k3, k4 = jax.random.split(key, 5)

    # Lane-aligned case (batch x num_classes) -> pure-reshape path, no padding.
    N, C = 8, 128
    x = jax.random.normal(k0, (N, C), dtype=jnp.float32) * 2.0
    y_hard = (jax.random.uniform(k1, (N, C)) > 0.8).astype(jnp.float32)
    y_soft = jax.random.uniform(k2, (N, C), dtype=jnp.float32)

    # Ragged case (exercises padding with the zero-contribution pad values).
    N2, C2 = 5, 37
    x2 = jax.random.normal(k3, (N2, C2), dtype=jnp.float32) * 2.0
    y2 = (jax.random.uniform(k4, (N2, C2)) > 0.7).astype(jnp.float32)

    checks = [
        (focal_asymmetric_loss(x, y_hard, "mean", hard_targets=True),
         _reference(x, y_hard, "mean")),
        (focal_asymmetric_loss(x, y_hard, "sum", hard_targets=True),
         _reference(x, y_hard, "sum")),
        (focal_asymmetric_loss(x, y_soft, "mean"),            # soft targets
         _reference(x, y_soft, "mean")),
        (focal_asymmetric_loss(x2, y2, "mean", hard_targets=True),
         _reference(x2, y2, "mean")),
    ]
    for out, ref in checks:
        out = jax.block_until_ready(out)
        ref = jax.block_until_ready(ref)
        assert jnp.allclose(out, ref, rtol=1e-4, atol=1e-6), (out, ref)

    print("KERNEL_OK")
</pallas_src>

<mosaic_0001>
module attributes {stable_mosaic.version = 11 : i64} {
  func.func @_focal_asym_kernel(%arg0: i32, %arg1: memref<8x128xf32, #tpu.memory_space<vmem>>, %arg2: memref<8x128xf32, #tpu.memory_space<vmem>>, %arg3: memref<8x128xf32, #tpu.memory_space<vmem>>) attributes {dimension_semantics = [#tpu.dimension_semantics<parallel>], iteration_bounds = array<i64: 1>, scalar_prefetch = 0 : i64, scratch_operands = 0 : i64, tpu.core_type = #tpu.core_type<tc>, window_params = [{transform_indices = @transform_0, window_bounds = array<i64: 8, 128>}, {transform_indices = @transform_1, window_bounds = array<i64: 8, 128>}, {transform_indices = @transform_2, window_bounds = array<i64: 8, 128>}]} {
    %c0 = arith.constant 0 : index
    %c0_0 = arith.constant 0 : index
    %0 = vector.load %arg1[%c0, %c0_0] : memref<8x128xf32, #tpu.memory_space<vmem>>, vector<8x128xf32>
    %c0_1 = arith.constant 0 : index
    %c0_2 = arith.constant 0 : index
    %1 = vector.load %arg2[%c0_1, %c0_2] : memref<8x128xf32, #tpu.memory_space<vmem>>, vector<8x128xf32>
    %cst = arith.constant 5.000000e-01 : f32
    %2 = vector.broadcast %cst : f32 to vector<8x128xf32>
    %3 = arith.mulf %0, %2 : vector<8x128xf32>
    %4 = math.tanh %3 : vector<8x128xf32>
    %cst_3 = arith.constant 5.000000e-01 : f32
    %5 = vector.broadcast %cst_3 : f32 to vector<8x128xf32>
    %6 = arith.mulf %5, %4 : vector<8x128xf32>
    %cst_4 = arith.constant 5.000000e-01 : f32
    %7 = vector.broadcast %cst_4 : f32 to vector<8x128xf32>
    %8 = arith.addf %7, %6 : vector<8x128xf32>
    %cst_5 = arith.constant 5.000000e-01 : f32
    %9 = vector.broadcast %cst_5 : f32 to vector<8x128xf32>
    %10 = arith.mulf %9, %4 : vector<8x128xf32>
    %cst_6 = arith.constant 5.000000e-01 : f32
    %11 = vector.broadcast %cst_6 : f32 to vector<8x128xf32>
    %12 = arith.subf %11, %10 : vector<8x128xf32>
    %cst_7 = arith.constant 5.000000e-02 : f32
    %13 = vector.broadcast %cst_7 : f32 to vector<8x128xf32>
    %14 = arith.addf %12, %13 : vector<8x128xf32>
    %cst_8 = arith.constant 1.000000e+00 : f32
    %15 = vector.broadcast %cst_8 : f32 to vector<8x128xf32>
    %16 = arith.minimumf %14, %15 : vector<8x128xf32>
    %cst_9 = arith.constant 0.000000e+00 : f32
    %17 = vector.broadcast %cst_9 : f32 to vector<8x128xf32>
    %18 = arith.cmpf ogt, %1, %17 : vector<8x128xf32>
    %19 = arith.select %18, %8, %16 : vector<8x128xi1>, vector<8x128xf32>
    %cst_10 = arith.constant 9.99999993E-9 : f32
    %20 = vector.broadcast %cst_10 : f32 to vector<8x128xf32>
    %21 = arith.maximumf %19, %20 : vector<8x128xf32>
    %22 = math.log %21 : vector<8x128xf32>
    %cst_11 = arith.constant 1.000000e+00 : f32
    %cst_12 = arith.constant 4.000000e+00 : f32
    %23 = vector.broadcast %cst_11 : f32 to vector<8x128xf32>
    %24 = vector.broadcast %cst_12 : f32 to vector<8x128xf32>
    %25 = arith.select %18, %23, %24 : vector<8x128xi1>, vector<8x128xf32>
    %cst_13 = arith.constant 1.000000e+00 : f32
    %26 = vector.broadcast %cst_13 : f32 to vector<8x128xf32>
    %27 = arith.subf %26, %19 : vector<8x128xf32>
    %cst_14 = arith.constant 2.000000e+00 : f32
    %28 = vector.broadcast %cst_14 : f32 to vector<8x128xf32>
    %29 = arith.mulf %28, %27 : vector<8x128xf32>
    %30 = arith.addf %25, %29 : vector<8x128xf32>
    %cst_15 = arith.constant 1.17549435E-38 : f32
    %31 = vector.broadcast %cst_15 : f32 to vector<8x128xf32>
    %32 = arith.maximumf %27, %31 : vector<8x128xf32>
    %33 = math.log %32 : vector<8x128xf32>
    %34 = arith.mulf %30, %33 : vector<8x128xf32>
    %35 = math.exp %34 : vector<8x128xf32>
    %cst_16 = arith.constant 0.000000e+00 : f32
    %36 = vector.broadcast %cst_16 : f32 to vector<8x128xf32>
    %37 = arith.cmpf ogt, %27, %36 : vector<8x128xf32>
    %cst_17 = arith.constant 0.000000e+00 : f32
    %38 = vector.broadcast %cst_17 : f32 to vector<8x128xf32>
    %39 = arith.select %37, %35, %38 : vector<8x128xi1>, vector<8x128xf32>
    %40 = arith.mulf %22, %39 : vector<8x128xf32>
    %c0_18 = arith.constant 0 : index
    %c0_19 = arith.constant 0 : index
    %41 = vector.load %arg3[%c0_18, %c0_19] : memref<8x128xf32, #tpu.memory_space<vmem>>, vector<8x128xf32>
    tpu.vector_store %arg3[%c0_18, %c0_19], %40 {strides = array<i32>} : memref<8x128xf32, #tpu.memory_space<vmem>>, vector<8x128xf32>,
    return
  }
  func.func @transform_0(%arg0: i32) -> (i32, i32) {
    %c0_i32 = arith.constant 0 : i32
    %c0_i32_0 = arith.constant 0 : i32
    return %arg0, %c0_i32 : i32, i32
  }
  func.func @transform_1(%arg0: i32) -> (i32, i32) {
    %c0_i32 = arith.constant 0 : i32
    %c0_i32_0 = arith.constant 0 : i32
    return %arg0, %c0_i32 : i32, i32
  }
  func.func @transform_2(%arg0: i32) -> (i32, i32) {
    %c0_i32 = arith.constant 0 : i32
    %c0_i32_0 = arith.constant 0 : i32
    return %arg0, %c0_i32 : i32, i32
  }
}

</mosaic_0001>

<llo_original>
// kernel: tpu_custom_call.1
$region0: #{tpu_custom_call.1}
  #allocation0 [shape = 'u32[]', space=smem, size = 0x4, offset = 0x4, fixed_abs, tag = 'smem constant byte address 0x4 - core index']
  #allocation1 [shape = 'u32[72,128]{1,0:T(1,128)}', space=vmem, size = 0x9000, scoped, tag = 'internal scratch']
  %s0 = inlined_call_operand.hbm [shape: f32[8,128], index: 0, kind: input, shape index: {}]
  %s1 = inlined_call_operand.hbm [shape: f32[8,128], index: 1, kind: input, shape index: {}]
  %s2 = inlined_call_operand.hbm [shape: f32[8,128], index: 2, kind: output, shape index: {}]
  %s3 = sld [smem:[#allocation0]]
  $region26: #{tpu_custom_call.1} parent=0
    _
  %s5 = ssub.s32 1, %s3
  %s6 = scalar_select 0, %s5, %s3
  $region1: #{tpu_custom_call.1} parent=0
    #allocation2 [shape = 'u8[4096]{0}', space=vmem, size = 0x1000, scoped, tag = 'input window, operand 0, single buffered']
    #allocation3 [shape = 's32[1]{0}', space=sflag, size = 0x4, scoped, tag = 'scoped memory for tpu_custom_call.1']
    #allocation4 [shape = 's32[1]{0}', space=sflag, size = 0x4, scoped, tag = 'scoped memory for tpu_custom_call.1']
    #allocation5 [shape = 'u8[4096]{0}', space=vmem, size = 0x1000, scoped, tag = 'input window, operand 1, single buffered']
    #allocation6 [shape = 's32[1]{0}', space=sflag, size = 0x4, scoped, tag = 'scoped memory for tpu_custom_call.1']
    #allocation7 [shape = 'u8[4096]{0}', space=vmem, size = 0x1000, scoped, tag = 'output window, operand 0, single buffered']
    %7 = vsyncpa [#allocation3], 0
    %8 = vsyncpa [#allocation6], 0
    %9 = vsyncpa [#allocation4], 0
    // Predicated region
    $region2: #{tpu_custom_call.1} parent=1 // pred_check
      _
    $region3: #{tpu_custom_call.1} parent=1 // pred_check_branch
      %11 = sbr.rel (0) target = $region5
    $region4: #{tpu_custom_call.1} parent=1 // pred_region
      %13 = vsyncadd [#allocation3], 0
      %s15 = sshll.u32 %s0, 4
      %s16 = int_to_ptr.hbm [resolvable:$true] %s15
      %s17 = sshll.u32 [#allocation2], 4
      %s18 = int_to_ptr.vmem [resolvable:$true] %s17
      %20 = dma.hbm_to_vmem [thread:$0]  %s16, 128, %s18, [#allocation3]
    $region5: #{tpu_custom_call.1} parent=1 // pred_fallthru
      _
    // Predicated region
    $region6: #{tpu_custom_call.1} parent=1 // pred_check
      _
    $region7: #{tpu_custom_call.1} parent=1 // pred_check_branch
      %22 = sbr.rel (0) target = $region9
    $region8: #{tpu_custom_call.1} parent=1 // pred_region
      %24 = vsyncadd [#allocation6], 0
      %s26 = sshll.u32 %s1, 4
      %s27 = int_to_ptr.hbm [resolvable:$true] %s26
      %s28 = sshll.u32 [#allocation5], 4
      %s29 = int_to_ptr.vmem [resolvable:$true] %s28
      %31 = dma.hbm_to_vmem [thread:$0]  %s27, 128, %s29, [#allocation6]
    $region9: #{tpu_custom_call.1} parent=1 // pred_fallthru
      _
    // Predicated region
    $region10: #{tpu_custom_call.1} parent=1 // pred_check
      _
    $region11: #{tpu_custom_call.1} parent=1 // pred_check_branch
      %33 = sbr.rel (0) target = $region13
    $region12: #{tpu_custom_call.1} parent=1 // pred_region
      %35 = dma.done [#allocation3], 128
    $region13: #{tpu_custom_call.1} parent=1 // pred_fallthru
      _
    // Predicated region
    $region14: #{tpu_custom_call.1} parent=1 // pred_check
      _
    $region15: #{tpu_custom_call.1} parent=1 // pred_check_branch
      %37 = sbr.rel (0) target = $region17
    $region16: #{tpu_custom_call.1} parent=1 // pred_region
      %39 = dma.done [#allocation6], 128
    $region17: #{tpu_custom_call.1} parent=1 // pred_fallthru
      _
    %v40 = vld [vmem:[#allocation2] sm:$0xff]
    %v41 = vld [vmem:[#allocation5] sm:$0xff]
    %v42 = vmul.f32 %v40, 0.5
    %v43 = vtanh.pop %v42
    %v44 = vmul.f32 %v43, 0.5
    %v45 = vadd.f32 %v44, 0.5
    %v46 = vsub.f32 0.5, %v44
    %v47 = vadd.f32 %v46, 0.05
    %v48 = vmin.f32 %v47, 1.0
    %vm49 = vcmp.gt.f32.partialorder %v41, 0.0
    %v50 = vsel %vm49, %v45, %v48
    %v51 = vmax.f32 %v50, 1e-08
    %v52 = vlog2.pop %v51
    %v53 = vmul.f32 %v52, 0.6931472
    %v54 = vsel %vm49, 1.0, 4.0
    %v55 = vsub.f32 1.0, %v50
    %v56 = vmul.f32 %v55, 2.0
    %v57 = vadd.f32 %v54, %v56
    %v58 = vmax.f32 %v55, 1.1754944e-38
    %v59 = vlog2.pop %v58
    %v60 = vmul.f32 %v59, 0.6931472
    %v61 = vmul.f32 %v57, %v60
    %v62 = vmul.f32 %v61, 1.442695
    %v63 = vpow.pop %v62
    %vm64 = vcmp.gt.f32.partialorder %v55, 0.0
    %v65 = vsel %vm64, %v63, 0.0
    %v66 = vmul.f32 %v53, %v65
    %67 = vst [vmem:[#allocation7] sm:$0xff] %v66
    // Predicated region
    $region18: #{tpu_custom_call.1} parent=1 // pred_check
      _
    $region19: #{tpu_custom_call.1} parent=1 // pred_check_branch
      %69 = sbr.rel (0) target = $region21
    $region20: #{tpu_custom_call.1} parent=1 // pred_region
      %71 = vsyncadd [#allocation4], 0
      %s73 = sshll.u32 [#allocation7], 4
      %s74 = int_to_ptr.vmem [resolvable:$true] %s73
      %s75 = sshll.u32 %s2, 4
      %s76 = int_to_ptr.hbm [resolvable:$true] %s75
      %78 = dma.vmem_to_hbm [thread:$0]  %s74, 128, %s76, [#allocation4]
    $region21: #{tpu_custom_call.1} parent=1 // pred_fallthru
      _
    // Predicated region
    $region22: #{tpu_custom_call.1} parent=1 // pred_check
      _
    $region23: #{tpu_custom_call.1} parent=1 // pred_check_branch
      %80 = sbr.rel (0) target = $region25
    $region24: #{tpu_custom_call.1} parent=1 // pred_region
      %82 = dma.done [#allocation4], 128
    $region25: #{tpu_custom_call.1} parent=1 // pred_fallthru
      _
    %83 = vsyncpa [#allocation3], 1
    %84 = vsyncpa [#allocation6], 1
    %85 = vsyncpa [#allocation4], 1

</llo_original>
